<compile_context>
chip_gen: v7x
topology: tpu7x:2x2x1
jax: 0.10.0
libtpu: 0.0.40
codegen_flags: <defaults>
</compile_context>

<pallas_src>
import functools

import jax
import jax.numpy as jnp
from jax.experimental import pallas as pl
from jax.experimental.pallas import tpu as pltpu


_N_CORES = 2   # v7x has 2 TensorCores/chip; harmless (serial) on v5e/v6e


def _round_up(x, m):
    return (x + m - 1) // m * m


def _label_smoothing_kernel(pred_ref, tgt_ref, out_ref, *,
                            coef_mls, coef_tgt, coef_sum,
                            n_rows, tile_n, blocks_per_core):
    c = pl.program_id(0)          # megacore split index
    i = pl.program_id(1)          # row-tile index within this core's slice

    # init this core's resident (1, 1) accumulator block
    @pl.when(i == 0)
    def _():
        out_ref[...] = jnp.zeros_like(out_ref)

    x = pred_ref[...].astype(jnp.float32)            # (tile_n, C) — f32 math
    tn, n_classes = x.shape

    # row-wise log-softmax pieces on the raw logits (logp never materialized)
    m = jnp.max(x, axis=-1, keepdims=True)                         # (tile_n, 1)
    lse = jnp.log(jnp.sum(jnp.exp(x - m), axis=-1, keepdims=True))  # (tile_n, 1)
    sum_x = jnp.sum(x, axis=-1, keepdims=True)                      # (tile_n, 1)

    lane = jax.lax.broadcasted_iota(jnp.int32, (tn, n_classes), 1)
    tgt = tgt_ref[...]                                              # (tile_n, 1)
    x_tgt = jnp.sum(jnp.where(lane == tgt, x, 0.0), axis=-1, keepdims=True)

    per_row = (jnp.float32(coef_mls) * (m + lse)
               - jnp.float32(coef_tgt) * x_tgt
               - jnp.float32(coef_sum) * sum_x)                     # (tile_n, 1)

    # mask rows of the ragged final tile / redundant clamped megacore steps
    row0 = (c * blocks_per_core + i) * tile_n
    row = jax.lax.broadcasted_iota(jnp.int32, (tn, 1), 0) + row0
    per_row = jnp.where(row < n_rows, per_row, 0.0)

    out_ref[...] += jnp.sum(per_row, axis=0, keepdims=True)         # (1, 1)


def label_smoothing_loss(pred, target, *, classes=30, smoothing=0.05,
                         tile_n=4096):
    """pred: (N, C) float logits, target: (N,) int class indices -> scalar f32."""
    N, C = pred.shape
    assert C == classes
    confidence = 1.0 - smoothing
    smooth_val = smoothing / (classes - 1)
    # coefficients of the folded two-term form (exact in Python float64)
    coef_tgt = confidence - smooth_val                    # weight of x[tgt]
    coef_sum = smooth_val                                 # weight of sum_c(x)
    coef_mls = confidence + smooth_val * (classes - 1)    # weight of (m + lse)

    # sublane-aligned row tile, never (much) larger than the batch itself
    tile_n = max(8, min(int(tile_n), _round_up(N, 8)))
    tile_n = _round_up(tile_n, 8)
    n_blocks = pl.cdiv(N, tile_n)
    blocks_per_core = pl.cdiv(n_blocks, _N_CORES)

    tgt2d = target.astype(jnp.int32).reshape(N, 1)

    def block_index(c, i):
        # Clamp so redundant tail steps of the 2-way split stay in bounds; the
        # corresponding rows are masked to zero inside the kernel.
        return (jnp.minimum(c * blocks_per_core + i, n_blocks - 1), 0)

    kernel = functools.partial(
        _label_smoothing_kernel,
        coef_mls=float(coef_mls), coef_tgt=float(coef_tgt),
        coef_sum=float(coef_sum),
        n_rows=N, tile_n=tile_n, blocks_per_core=blocks_per_core)

    # VMEM budget: pred/target blocks are stored 128-lane padded and
    # double-buffered; leave headroom for Mosaic temporaries.  Cap well below
    # v7x's 64 MiB physical VMEM.
    itemsize = max(jnp.dtype(pred.dtype).itemsize, 4)
    vmem_limit = int(min(48 << 20, max(32 << 20, 12 * tile_n * 128 * itemsize)))

    out = pl.pallas_call(
        kernel,
        out_shape=jax.ShapeDtypeStruct((_N_CORES, 1, 1), jnp.float32),
        grid_spec=pltpu.PrefetchScalarGridSpec(
            num_scalar_prefetch=0,
            grid=(_N_CORES, blocks_per_core),
            in_specs=[
                pl.BlockSpec((tile_n, C), block_index),   # logits, native dtype
                pl.BlockSpec((tile_n, 1), block_index),   # targets
            ],
            # per-core resident (1, 1) accumulator; leading core axis squeezed
            out_specs=pl.BlockSpec((None, 1, 1), lambda c, i: (c, 0, 0)),
        ),
        compiler_params=pltpu.CompilerParams(
            dimension_semantics=("parallel", "arbitrary"),
            vmem_limit_bytes=vmem_limit,
        ),
    )(pred, tgt2d)

    # combine the two per-core partial sums and take the batch mean
    return jnp.sum(out) / jnp.float32(N)


def _reference(pred, target, *, classes=30, smoothing=0.05):
    """Pure-JAX reference replicating the PyTorch forward exactly."""
    confidence = 1.0 - smoothing
    logp = jax.nn.log_softmax(pred.astype(jnp.float32), axis=-1)
    true_dist = jnp.full_like(logp, smoothing / (classes - 1))
    true_dist = true_dist.at[jnp.arange(pred.shape[0]), target].set(confidence)
    return jnp.mean(jnp.sum(-true_dist * logp, axis=-1))


if __name__ == "__main__":
    key = jax.random.PRNGKey(0)
    k1, k2, k3, k4 = jax.random.split(key, 4)

    # case 1: tiny batch — single tile; the second (clamped) core step is
    # fully masked out.
    N, C = 8, 30
    pred = jax.random.normal(k1, (N, C), dtype=jnp.float32)
    target = jax.random.randint(k2, (N,), 0, C, dtype=jnp.int32)
    loss = jax.block_until_ready(label_smoothing_loss(pred, target, classes=C))
    ref = _reference(pred, target, classes=C)
    assert jnp.allclose(loss, ref, rtol=1e-5, atol=1e-5), (loss, ref)

    # case 2: multi-tile grid, ragged last tile, odd tile count across the
    # 2-way split (exercises the clamped block index and the row mask).
    N2 = 300
    pred2 = jax.random.normal(k3, (N2, C), dtype=jnp.float32)
    target2 = jax.random.randint(k4, (N2,), 0, C, dtype=jnp.int32)
    loss2 = jax.block_until_ready(
        label_smoothing_loss(pred2, target2, classes=C, tile_n=64))
    ref2 = _reference(pred2, target2, classes=C)
    assert jnp.allclose(loss2, ref2, rtol=1e-5, atol=1e-5), (loss2, ref2)

    print("KERNEL_OK")
</pallas_src>

<mosaic_0001>
module attributes {stable_mosaic.version = 11 : i64} {
  func.func @_label_smoothing_kernel(%arg0: i32, %arg1: i32, %arg2: memref<8x30xf32, #tpu.memory_space<vmem>>, %arg3: memref<8x1xi32, #tpu.memory_space<vmem>>, %arg4: memref<1x1x1xf32, #tpu.memory_space<vmem>>) attributes {dimension_semantics = [#tpu.dimension_semantics<parallel>, #tpu.dimension_semantics<arbitrary>], iteration_bounds = array<i64: 2, 1>, scalar_prefetch = 0 : i64, scratch_operands = 0 : i64, tpu.core_type = #tpu.core_type<tc>, window_params = [{transform_indices = @transform_0, window_bounds = array<i64: 8, 30>}, {transform_indices = @transform_1, window_bounds = array<i64: 8, 1>}, {transform_indices = @transform_2, window_bounds = array<i64: 1, 1, 1>}]} {
    %c0_i32 = arith.constant 0 : i32
    %0 = arith.cmpi eq, %arg1, %c0_i32 : i32
    %1 = arith.extui %0 : i1 to i32
    %c0_i32_0 = arith.constant 0 : i32
    %2 = arith.cmpi ne, %1, %c0_i32_0 : i32
    scf.if %2 {
      %cst_20 = arith.constant 0.000000e+00 : f32
      %49 = vector.broadcast %cst_20 : f32 to vector<1x1xf32>
      %c0_21 = arith.constant 0 : index
      %c0_22 = arith.constant 0 : index
      %c0_23 = arith.constant 0 : index
      %50 = vector.load %arg4[%c0_21, %c0_22, %c0_23] : memref<1x1x1xf32, #tpu.memory_space<vmem>>, vector<1x1x1xf32>
      %51 = vector.shape_cast %50 : vector<1x1x1xf32> to vector<1x1xf32>
      %52 = vector.shape_cast %49 : vector<1x1xf32> to vector<1x1x1xf32>
      tpu.vector_store %arg4[%c0_21, %c0_22, %c0_23], %52 {strides = array<i32>} : memref<1x1x1xf32, #tpu.memory_space<vmem>>, vector<1x1x1xf32>,
    } else {
    }
    %c0 = arith.constant 0 : index
    %c0_1 = arith.constant 0 : index
    %3 = vector.load %arg2[%c0, %c0_1] : memref<8x30xf32, #tpu.memory_space<vmem>>, vector<8x30xf32>
    %cst = arith.constant dense<0xFF800000> : vector<8xf32>
    %4 = vector.multi_reduction <maximumf>, %3, %cst [1] : vector<8x30xf32> to vector<8xf32>
    %5 = vector.shape_cast %4 : vector<8xf32> to vector<8x1xf32>
    %6 = vector.broadcast %5 : vector<8x1xf32> to vector<8x30xf32>
    %7 = arith.subf %3, %6 : vector<8x30xf32>
    %8 = math.exp %7 : vector<8x30xf32>
    %cst_2 = arith.constant dense<0.000000e+00> : vector<8xf32>
    %9 = vector.multi_reduction <add>, %8, %cst_2 [1] : vector<8x30xf32> to vector<8xf32>
    %10 = vector.shape_cast %9 : vector<8xf32> to vector<8x1xf32>
    %11 = math.log %10 : vector<8x1xf32>
    %cst_3 = arith.constant dense<0.000000e+00> : vector<8xf32>
    %12 = vector.multi_reduction <add>, %3, %cst_3 [1] : vector<8x30xf32> to vector<8xf32>
    %13 = vector.shape_cast %12 : vector<8xf32> to vector<8x1xf32>
    %14 = tpu.iota {dimensions = array<i32: 1>} : vector<8x30xi32>
    %c0_4 = arith.constant 0 : index
    %c0_5 = arith.constant 0 : index
    %15 = vector.load %arg3[%c0_4, %c0_5] : memref<8x1xi32, #tpu.memory_space<vmem>>, vector<8x1xi32>
    %16 = vector.broadcast %15 : vector<8x1xi32> to vector<8x30xi32>
    %17 = arith.cmpi eq, %14, %16 : vector<8x30xi32>
    %cst_6 = arith.constant 0.000000e+00 : f32
    %18 = vector.broadcast %cst_6 : f32 to vector<8x30xf32>
    %19 = arith.select %17, %3, %18 : vector<8x30xi1>, vector<8x30xf32>
    %cst_7 = arith.constant dense<0.000000e+00> : vector<8xf32>
    %20 = vector.multi_reduction <add>, %19, %cst_7 [1] : vector<8x30xf32> to vector<8xf32>
    %21 = vector.shape_cast %20 : vector<8xf32> to vector<8x1xf32>
    %22 = arith.addf %5, %11 : vector<8x1xf32>
    %cst_8 = arith.constant 1.000000e+00 : f32
    %23 = vector.broadcast %cst_8 : f32 to vector<8x1xf32>
    %24 = arith.mulf %23, %22 : vector<8x1xf32>
    %cst_9 = arith.constant 0.948275864 : f32
    %25 = vector.broadcast %cst_9 : f32 to vector<8x1xf32>
    %26 = arith.mulf %25, %21 : vector<8x1xf32>
    %27 = arith.subf %24, %26 : vector<8x1xf32>
    %cst_10 = arith.constant 0.00172413792 : f32
    %28 = vector.broadcast %cst_10 : f32 to vector<8x1xf32>
    %29 = arith.mulf %28, %13 : vector<8x1xf32>
    %30 = arith.subf %27, %29 : vector<8x1xf32>
    %c1_i32 = arith.constant 1 : i32
    %31 = arith.muli %arg0, %c1_i32 : i32
    %32 = arith.addi %31, %arg1 : i32
    %c8_i32 = arith.constant 8 : i32
    %33 = arith.muli %32, %c8_i32 : i32
    %34 = tpu.iota {dimensions = array<i32: 0>} : vector<8x1xi32>
    %35 = vector.broadcast %33 : i32 to vector<8x1xi32>
    %36 = arith.addi %34, %35 : vector<8x1xi32>
    %c8_i32_11 = arith.constant 8 : i32
    %37 = vector.broadcast %c8_i32_11 : i32 to vector<8x1xi32>
    %38 = arith.cmpi slt, %36, %37 : vector<8x1xi32>
    %cst_12 = arith.constant 0.000000e+00 : f32
    %39 = vector.broadcast %cst_12 : f32 to vector<8x1xf32>
    %40 = arith.select %38, %30, %39 : vector<8x1xi1>, vector<8x1xf32>
    %c0_13 = arith.constant 0 : index
    %c0_14 = arith.constant 0 : index
    %c0_15 = arith.constant 0 : index
    %41 = vector.load %arg4[%c0_13, %c0_14, %c0_15] : memref<1x1x1xf32, #tpu.memory_space<vmem>>, vector<1x1x1xf32>
    %42 = vector.shape_cast %41 : vector<1x1x1xf32> to vector<1x1xf32>
    %cst_16 = arith.constant dense<0.000000e+00> : vector<1xf32>
    %43 = vector.multi_reduction <add>, %40, %cst_16 [0] : vector<8x1xf32> to vector<1xf32>
    %44 = vector.shape_cast %43 : vector<1xf32> to vector<1x1xf32>
    %45 = arith.addf %42, %44 : vector<1x1xf32>
    %c0_17 = arith.constant 0 : index
    %c0_18 = arith.constant 0 : index
    %c0_19 = arith.constant 0 : index
    %46 = vector.load %arg4[%c0_17, %c0_18, %c0_19] : memref<1x1x1xf32, #tpu.memory_space<vmem>>, vector<1x1x1xf32>
    %47 = vector.shape_cast %46 : vector<1x1x1xf32> to vector<1x1xf32>
    %48 = vector.shape_cast %45 : vector<1x1xf32> to vector<1x1x1xf32>
    tpu.vector_store %arg4[%c0_17, %c0_18, %c0_19], %48 {strides = array<i32>} : memref<1x1x1xf32, #tpu.memory_space<vmem>>, vector<1x1x1xf32>,
    return
  }
  func.func @transform_0(%arg0: i32, %arg1: i32) -> (i32, i32) {
    %c1_i32 = arith.constant 1 : i32
    %0 = arith.muli %arg0, %c1_i32 : i32
    %1 = arith.addi %0, %arg1 : i32
    %c0_i32 = arith.constant 0 : i32
    %2 = arith.minsi %1, %c0_i32 : i32
    %c0_i32_0 = arith.constant 0 : i32
    %c0_i32_1 = arith.constant 0 : i32
    return %2, %c0_i32_0 : i32, i32
  }
  func.func @transform_1(%arg0: i32, %arg1: i32) -> (i32, i32) {
    %c1_i32 = arith.constant 1 : i32
    %0 = arith.muli %arg0, %c1_i32 : i32
    %1 = arith.addi %0, %arg1 : i32
    %c0_i32 = arith.constant 0 : i32
    %2 = arith.minsi %1, %c0_i32 : i32
    %c0_i32_0 = arith.constant 0 : i32
    %c0_i32_1 = arith.constant 0 : i32
    return %2, %c0_i32_0 : i32, i32
  }
  func.func @transform_2(%arg0: i32, %arg1: i32) -> (i32, i32, i32) {
    %c0_i32 = arith.constant 0 : i32
    %c0_i32_0 = arith.constant 0 : i32
    %c0_i32_1 = arith.constant 0 : i32
    return %arg0, %c0_i32, %c0_i32_0 : i32, i32, i32
  }
}

</mosaic_0001>

<llo_original>
// kernel: tpu_custom_call.1
$region0: #{tpu_custom_call.1}
  #allocation0 [shape = 'u32[]', space=smem, size = 0x4, offset = 0x4, fixed_abs, tag = 'smem constant byte address 0x4 - core index']
  #allocation1 [shape = 'u32[144,128]{1,0:T(1,128)}', space=vmem, size = 0x12000, scoped, tag = 'internal scratch']
  %s0 = inlined_call_operand.vmem [shape: f32[8,30], index: 0, kind: input, shape index: {}]
  %s1 = inlined_call_operand.vmem [shape: s32[8,1], index: 1, kind: input, shape index: {}]
  %s2 = inlined_call_operand.vmem [shape: f32[2,1,1], index: 2, kind: output, shape index: {}]
  %s3 = sld [smem:[#allocation0]]
  $region45: #{tpu_custom_call.1} parent=0
    _
  %s5 = ssub.s32 1, %s3
  %s6 = scalar_select 0, %s5, %s3
  loop: start=0, step=1, limit=4
  $region2: #{tpu_custom_call.1} parent=0 // loop_pre_header
    _
  $region3: #{tpu_custom_call.1} parent=0 // loop_header
    %s8 = sphi 0, %s12
    %p9 = scmp.ge.s32.totalorder %s8, 4
    %s15 = sphi 0, %s27
    %s16 = sphi 0, %s23
    %s17 = sphi 0, %s15
    %s18 = sphi 0, %s16
    %s19 = sphi 0, %s17
    %s20 = sphi 0, %s18
    %s36 = sphi 0, %s38
    %s39 = sphi 0, %s36
    %s40 = sphi 0, %s39
    %s56 = sphi 0, %s40
    %s68 = sphi 0, %s70
    %s71 = sphi 0, %s68
    %s72 = sphi 0, %s71
    %s88 = sphi 0, %s72
    %s94 = sphi 0, %s96
    %s97 = sphi 0, %s94
    %s98 = sphi 0, %s97
    %s114 = sphi 0, %s98
  $region4: #{tpu_custom_call.1} parent=0 // loop_header_branch
    %11 = sbr.rel (%p9) target = $region8
  $region5: #{tpu_custom_call.1} parent=0 // loop_body
    %s13 = ssub.s32 %s8, 1
    %s14 = ssub.s32 %s8, 2
    %s21 = sadd.s32 1, %s16
    %p22 = scmp.ge.s32.totalorder %s21, 1
    %s23 = scalar_select %p22, 0, %s21
    %s24 = sadd.s32 1, %s15
    %s25 = scalar_select %p22, %s24, %s15
    %p26 = scmp.ge.s32.totalorder %s25, 2
    %s27 = scalar_select %p26, 0, %s25
    %s28 = sadd.s32 %s15, %s16
    %p29 = scmp.lt.s32.totalorder %s28, 0
    %s30 = scalar_select %p29, %s28, 0
    %s31 = sadd.s32 %s27, %s23
    %p32 = scmp.lt.s32.totalorder %s31, 0
    %s33 = scalar_select %p32, %s31, 0
    %s34 = ssub.s32 %s30, %s33
    %p35 = scmp.eq.s32.totalorder %s34, 0
    %s37 = sadd.s32 %s36, 1
    %s38 = scalar_select %p35, %s36, %s37
    %p41 = pneg %p35
    %p42 = scmp.eq.s32.totalorder %s8, 1
    %p43 = por %p41, %p42
    %p44 = scmp.ne.s32.totalorder %s36, %s39
    %p45 = scmp.eq.s32.totalorder %s8, 0
    %p46 = por %p44, %p45
    %p47 = scmp.ne.s32.totalorder %s36, %s39
    %p48 = scmp.eq.s32.totalorder %s13, 1
    %p49 = por %p47, %p48
    %p50 = scmp.ne.s32.totalorder %s39, %s40
    %p51 = scmp.eq.s32.totalorder %s13, 0
    %p52 = por %p50, %p51
    %p53 = scmp.ne.s32.totalorder %s39, %s40
    %p54 = scmp.eq.s32.totalorder %s14, 1
    %p55 = por %p53, %p54
    %p57 = scmp.ne.s32.totalorder %s40, %s56
    %p58 = scmp.eq.s32.totalorder %s14, 0
    %p59 = por %p57, %p58
    %s60 = sadd.s32 %s15, %s16
    %p61 = scmp.lt.s32.totalorder %s60, 0
    %s62 = scalar_select %p61, %s60, 0
    %s63 = sadd.s32 %s27, %s23
    %p64 = scmp.lt.s32.totalorder %s63, 0
    %s65 = scalar_select %p64, %s63, 0
    %s66 = ssub.s32 %s62, %s65
    %p67 = scmp.eq.s32.totalorder %s66, 0
    %s69 = sadd.s32 %s68, 1
    %s70 = scalar_select %p67, %s68, %s69
    %p73 = pneg %p67
    %p74 = scmp.eq.s32.totalorder %s8, 1
    %p75 = por %p73, %p74
    %p76 = scmp.ne.s32.totalorder %s68, %s71
    %p77 = scmp.eq.s32.totalorder %s8, 0
    %p78 = por %p76, %p77
    %p79 = scmp.ne.s32.totalorder %s68, %s71
    %p80 = scmp.eq.s32.totalorder %s13, 1
    %p81 = por %p79, %p80
    %p82 = scmp.ne.s32.totalorder %s71, %s72
    %p83 = scmp.eq.s32.totalorder %s13, 0
    %p84 = por %p82, %p83
    %p85 = scmp.ne.s32.totalorder %s71, %s72
    %p86 = scmp.eq.s32.totalorder %s14, 1
    %p87 = por %p85, %p86
    %p89 = scmp.ne.s32.totalorder %s72, %s88
    %p90 = scmp.eq.s32.totalorder %s14, 0
    %p91 = por %p89, %p90
    %s92 = ssub.s32 %s15, %s27
    %p93 = scmp.eq.s32.totalorder %s92, 0
    %s95 = sadd.s32 %s94, 1
    %s96 = scalar_select %p93, %s94, %s95
    %p99 = pneg %p93
    %p100 = scmp.eq.s32.totalorder %s8, 1
    %p101 = por %p99, %p100
    %p102 = scmp.ne.s32.totalorder %s94, %s97
    %p103 = scmp.eq.s32.totalorder %s8, 0
    %p104 = por %p102, %p103
    %p105 = scmp.ne.s32.totalorder %s94, %s97
    %p106 = scmp.eq.s32.totalorder %s13, 1
    %p107 = por %p105, %p106
    %p108 = scmp.ne.s32.totalorder %s97, %s98
    %p109 = scmp.eq.s32.totalorder %s13, 0
    %p110 = por %p108, %p109
    %p111 = scmp.ne.s32.totalorder %s97, %s98
    %p112 = scmp.eq.s32.totalorder %s14, 1
    %p113 = por %p111, %p112
    %p115 = scmp.ne.s32.totalorder %s98, %s114
    %p116 = scmp.eq.s32.totalorder %s14, 0
    %p117 = por %p115, %p116
    %p118 = scmp.le.s32.totalorder 1, %s8
    %p119 = scmp.lt.s32.totalorder %s8, 3
    %p120 = pnand %p118, %p119
    %p121 = pneg %p120
    // Predicated region
    $region9: #{tpu_custom_call.1} parent=5 // pred_check
      _
    $region10: #{tpu_custom_call.1} parent=5 // pred_check_branch
      %123 = sbr.rel (%p120) target = $region12
    $region11: #{tpu_custom_call.1} parent=5 // pred_region
      %s124 = ssub.s32 %s8, 1
    $region12: #{tpu_custom_call.1} parent=5 // pred_fallthru
      _
    %p125 = scmp.lt.s32.totalorder %s8, 2
    // Predicated region
    $region13: #{tpu_custom_call.1} parent=5 // pred_check
      %p126 = pneg %p125
    $region14: #{tpu_custom_call.1} parent=5 // pred_check_branch
      %128 = sbr.rel (%p126) target = $region16
    $region15: #{tpu_custom_call.1} parent=5 // pred_region
      // Predicated region
      $region17: #{tpu_custom_call.1} parent=15 // pred_check
        %p129 = pneg %p46
      $region18: #{tpu_custom_call.1} parent=15 // pred_check_branch
        %131 = sbr.rel (%p129) target = $region20
      $region19: #{tpu_custom_call.1} parent=15 // pred_region
        %s132 = sadd.s32 %s15, %s16
        %p133 = scmp.lt.s32.totalorder %s132, 0
        %s134 = scalar_select %p133, %s132, 0
        %p135 = scmp.lt.s32.totalorder %s134, 0
        %s136 = scalar_select %p135, %s134, 0
        %s137 = smul.addr %s136, 8
        %s138 = scalar_lea.vmem %s0, %s137
        %s139 = sadd.s32 %s15, %s16
        %p140 = scmp.lt.s32.totalorder %s139, 0
        %s141 = scalar_select %p140, %s139, 0
      $region20: #{tpu_custom_call.1} parent=15 // pred_fallthru
        _
      // Predicated region
      $region21: #{tpu_custom_call.1} parent=15 // pred_check
        %p142 = pneg %p78
      $region22: #{tpu_custom_call.1} parent=15 // pred_check_branch
        %144 = sbr.rel (%p142) target = $region24
      $region23: #{tpu_custom_call.1} parent=15 // pred_region
        %s145 = sadd.s32 %s15, %s16
        %p146 = scmp.lt.s32.totalorder %s145, 0
        %s147 = scalar_select %p146, %s145, 0
        %p148 = scmp.lt.s32.totalorder %s147, 0
        %s149 = scalar_select %p148, %s147, 0
        %s150 = smul.addr %s149, 8
        %s151 = scalar_lea.vmem %s1, %s150
        %s152 = sadd.s32 %s15, %s16
        %p153 = scmp.lt.s32.totalorder %s152, 0
        %s154 = scalar_select %p153, %s152, 0
      $region24: #{tpu_custom_call.1} parent=15 // pred_fallthru
        _
    $region16: #{tpu_custom_call.1} parent=5 // pred_fallthru
      _
    %p155 = scmp.le.s32.totalorder 1, %s8
    %p156 = scmp.lt.s32.totalorder %s8, 3
    %p157 = pnand %p155, %p156
    %p158 = pneg %p157
    // Predicated region
    $region25: #{tpu_custom_call.1} parent=5 // pred_check
      _
    $region26: #{tpu_custom_call.1} parent=5 // pred_check_branch
      %160 = sbr.rel (%p157) target = $region28
    $region27: #{tpu_custom_call.1} parent=5 // pred_region
      %s161 = ssub.s32 %s8, 1
      %s162 = sadd.s32 %s17, %s18
      %p163 = scmp.lt.s32.totalorder %s162, 0
      %s164 = scalar_select %p163, %s162, 0
      %p165 = scmp.lt.s32.totalorder %s164, 0
      %s166 = scalar_select %p165, %s164, 0
      %s167 = smul.addr %s166, 8
      %s168 = scalar_lea.vmem %s0, %s167
      %p169 = pneg %p52
      %p170 = pneg %p49
      %s171 = sadd.s32 %s17, %s18
      %p172 = scmp.lt.s32.totalorder %s171, 0
      %s173 = scalar_select %p172, %s171, 0
      %p174 = scmp.lt.s32.totalorder %s173, 0
      %s175 = scalar_select %p174, %s173, 0
      %s176 = smul.addr %s175, 8
      %s177 = scalar_lea.vmem %s1, %s176
      %p178 = pneg %p84
      %p179 = pneg %p81
      %p180 = pneg %p110
      %p181 = pneg %p107
      %p182 = scmp.lt.s32.totalorder %s17, 1
      %s183 = scalar_select %p182, %s17, 1
      %s184 = scalar_lea.vmem %s2, %s183
      %s185 = sadd.s32 %s17, %s18
      %p186 = scmp.lt.s32.totalorder %s185, 0
      %s187 = scalar_select %p186, %s185, 0
      %p188 = scmp.lt.s32.totalorder %s187, 0
      %s189 = scalar_select %p188, %s187, 0
      %s190 = smul.addr %s189, 8
      %s191 = scalar_lea.vmem %s0, %s190
      %s192 = sadd.s32 %s17, %s18
      %p193 = scmp.lt.s32.totalorder %s192, 0
      %s194 = scalar_select %p193, %s192, 0
      %s195 = sadd.s32 %s17, %s18
      %p196 = scmp.lt.s32.totalorder %s195, 0
      %s197 = scalar_select %p196, %s195, 0
      %p198 = scmp.lt.s32.totalorder %s197, 0
      %s199 = scalar_select %p198, %s197, 0
      %s200 = smul.addr %s199, 8
      %s201 = scalar_lea.vmem %s1, %s200
      %s202 = sadd.s32 %s17, %s18
      %p203 = scmp.lt.s32.totalorder %s202, 0
      %s204 = scalar_select %p203, %s202, 0
      %p205 = scmp.lt.s32.totalorder %s17, 1
      %s206 = scalar_select %p205, %s17, 1
      %s207 = scalar_lea.vmem %s2, %s206
      %p208 = scmp.eq.s32.totalorder %s18, 0
      // Predicated region
      $region29: #{tpu_custom_call.1} parent=27 // pred_check
        %p209 = pneg %p208
      $region30: #{tpu_custom_call.1} parent=27 // pred_check_branch
        %211 = sbr.rel (%p209) target = $region32
      $region31: #{tpu_custom_call.1} parent=27 // pred_region
        %vm212 = vcmask 0
        %213 = vst.msk [vmem:[%s207] sm:$0x1] %vm212, 0.0
      $region32: #{tpu_custom_call.1} parent=27 // pred_fallthru
        _
      %v214 = vld [vmem:[%s191] sm:$0xff]
      %vm215 = vcmask 244736
      %v216 = vsel %vm215, %v214, -inf
      %217 = vmax.xlane.f32.xlu0 %v216
      %v218 = vpop.xlane.xlu0 %217
      %v219 = vsub.f32 %v214, %v218
      %v220 = vmul.f32 %v219, 1.442695
      %v221 = vpow.pop %v220
      %v222 = vsel %vm215, %v221, 0.0
      %223 = vadd.xlane.f32.xlu0 %v222
      %v224 = vpop.xlane.xlu0 %223
      %v225 = vlog2.pop %v224
      %v226 = vmul.f32 %v225, 0.6931472
      %v227 = vsel %vm215, %v214, 0.0
      %228 = vadd.xlane.f32.xlu0 %v227
      %v229 = vpop.xlane.xlu0 %228
      %v230 = vlaneseq
      %v231 = vand.u32 %v230, 127
      %v232 = vld [vmem:[%s201] sm:$0xff]
      %233 = vset.pattern.permute.xlu0 0
      %234 = vperm.xlu0 %233, %v232
      %v235 = vpop.permute.xlu0 %234
      %vm236 = vcmp.eq.s32.totalorder %v231, %v235
      %v237 = vsel %vm236, %v214, 0.0
      %v238 = vsel %vm215, %v237, 0.0
      %239 = vadd.xlane.f32.xlu0 %v238
      %v240 = vpop.xlane.xlu0 %239
      %v241 = vadd.f32 %v218, %v226
      %v242 = vmul.f32 %v240, 0.94827586
      %v243 = vsub.f32 %v241, %v242
      %v244 = vmul.f32 %v229, 0.0017241379
      %v245 = vsub.f32 %v243, %v244
      %s246 = sadd.s32 %s17, %s18
      %s247 = smul.u32 %s246, 8
      %v248 = vlaneseq
      %v249 = vshrl.u32 %v248, 7
      %v250 = vstv %s247
      %v251 = vadd.s32 %v249, %v250
      %vm252 = vcmp.lt.s32.totalorder %v251, 8
      %v253 = vsel %vm252, %v245, 0.0
      %v254 = vld [vmem:[%s207] sm:$0x1]
      %v255 = vrot.slane %v253, 4
      %v256 = vadd.f32 %v253, %v255
      %v257 = vrot.slane %v256, 2
      %v258 = vadd.f32 %v256, %v257
      %v259 = vrot.slane %v258, 1
      %v260 = vadd.f32 %v258, %v259
      %v261 = vadd.f32 %v254, %v260
      %vm262 = vcmask 0
      %263 = vst.msk [vmem:[%s207] sm:$0x1] %vm262, %v261
      %p264 = scmp.lt.s32.totalorder %s17, 1
      %s265 = scalar_select %p264, %s17, 1
      %s266 = scalar_lea.vmem %s2, %s265
      // Predicated region
      $region33: #{tpu_custom_call.1} parent=27 // pred_check
        %p267 = pneg %p107
      $region34: #{tpu_custom_call.1} parent=27 // pred_check_branch
        %269 = sbr.rel (%p267) target = $region36
      $region35: #{tpu_custom_call.1} parent=27 // pred_region
        _
      $region36: #{tpu_custom_call.1} parent=27 // pred_fallthru
        _
    $region28: #{tpu_custom_call.1} parent=5 // pred_fallthru
      _
    %p270 = scmp.le.s32.totalorder 2, %s8
    // Predicated region
    $region37: #{tpu_custom_call.1} parent=5 // pred_check
      %p271 = pneg %p270
    $region38: #{tpu_custom_call.1} parent=5 // pred_check_branch
      %273 = sbr.rel (%p271) target = $region40
    $region39: #{tpu_custom_call.1} parent=5 // pred_region
      %s274 = ssub.s32 %s8, 2
      // Predicated region
      $region41: #{tpu_custom_call.1} parent=39 // pred_check
        %p275 = pneg %p113
      $region42: #{tpu_custom_call.1} parent=39 // pred_check_branch
        %277 = sbr.rel (%p275) target = $region44
      $region43: #{tpu_custom_call.1} parent=39 // pred_region
        %p278 = scmp.lt.s32.totalorder %s19, 1
        %s279 = scalar_select %p278, %s19, 1
        %s280 = scalar_lea.vmem %s2, %s279
      $region44: #{tpu_custom_call.1} parent=39 // pred_fallthru
        _
    $region40: #{tpu_custom_call.1} parent=5 // pred_fallthru
      _
  $region6: #{tpu_custom_call.1} parent=0 // loop_footer
    %s12 = sadd.s32 1, %s8
  $region7: #{tpu_custom_call.1} parent=0 // loop_footer_branch
    %7 = sbr.rel target = $region3
  $region8: #{tpu_custom_call.1} parent=0 // loop_exit
    _

</llo_original>
